<compile_context>
chip_gen: v7x
topology: tpu7x:2x2x1
jax: 0.10.0
libtpu: 0.0.40
codegen_flags: <defaults>
</compile_context>

<pallas_src>
import functools

import jax
import jax.numpy as jnp
from jax import lax
from jax.experimental import pallas as pl
from jax.experimental.pallas import tpu as pltpu

HIDDEN = 5
CLASSES = 3

_TILE_ROWS = 4096            # max batch rows per grid block
_TILE_VMEM_BUDGET = 4 << 20  # target lane-padded bytes per (x + out) buffer pair
_SMALL_BUDGET = 4 << 20      # whole-problem footprint below this -> grid-less call


def _round_up(n, m):
    return ((n + m - 1) // m) * m


def _round_down(n, m):
    return (n // m) * m


def _lane_padded_bytes(rows, cols, itemsize=4):
    """VMEM footprint of a (rows, cols) f32 tile after (8,128) padding."""
    return _round_up(max(rows, 1), 8) * _round_up(max(cols, 1), 128) * itemsize


def _choose_block_rows(batch, d):
    """Pick a batch tile that keeps the lane-padded x + out tiles ~4 MiB."""
    bytes_per_row = (_round_up(d, 128) + 128) * 4  # padded x row + padded out row
    rows = _round_down(max(_TILE_VMEM_BUDGET // bytes_per_row, 8), 8)
    rows = min(rows, _TILE_ROWS)
    if rows >= batch:
        return batch  # single full-extent block (bypasses the /8 rule)
    return rows


# ----------------------------------------------------------------------------
# Shared in-kernel MLP body
# ----------------------------------------------------------------------------
def _mlp_body(x_ref, w1_ref, b1_ref, w2_ref, b2_ref):
    x = x_ref[...]                                                     # (R, D)
    h = jnp.dot(x, w1_ref[...], preferred_element_type=jnp.float32)   # (R, 5)
    h = jnp.maximum(h + b1_ref[...], 0.0)                             # ReLU
    o = jnp.dot(h, w2_ref[...], preferred_element_type=jnp.float32)   # (R, 3)
    return jnp.maximum(o + b2_ref[...], 0.0)                          # ReLU


# ----------------------------------------------------------------------------
# Kernel 1: logits only
# ----------------------------------------------------------------------------
def _mlp_kernel(x_ref, w1_ref, b1_ref, w2_ref, b2_ref, o_ref):
    o_ref[...] = _mlp_body(x_ref, w1_ref, b1_ref, w2_ref, b2_ref).astype(
        o_ref.dtype)


# ----------------------------------------------------------------------------
# Kernel 2: fused MLP + mean softmax cross-entropy, batch-tiled accumulation
# ----------------------------------------------------------------------------
def _mlp_loss_kernel(x_ref, w1_ref, b1_ref, w2_ref, b2_ref, y_ref, loss_ref,
                     *, total_rows):
    step = pl.program_id(0)

    @pl.when(step == 0)
    def _():
        loss_ref[...] = jnp.zeros_like(loss_ref)

    logits = _mlp_body(x_ref, w1_ref, b1_ref, w2_ref, b2_ref)        # (R, C)
    rows = logits.shape[0]

    labels = y_ref[...]                                               # (R, 1) i32
    col = lax.broadcasted_iota(jnp.int32, (rows, CLASSES), 1)
    onehot = (col == labels).astype(jnp.float32)                      # (R, C)

    m = jnp.max(logits, axis=-1, keepdims=True)
    lse = jnp.log(jnp.sum(jnp.exp(logits - m), axis=-1, keepdims=True)) + m
    picked = jnp.sum(onehot * logits, axis=-1, keepdims=True)         # (R, 1)
    per_example = lse - picked                                        # (R, 1)

    # Mask rows past the true batch size (ragged last block reads padding).
    row_idx = lax.broadcasted_iota(jnp.int32, (rows, 1), 0) + step * rows
    per_example = jnp.where(row_idx < total_rows, per_example, 0.0)

    loss_ref[...] += jnp.sum(per_example, axis=0, keepdims=True)      # (1, 1)

    @pl.when(step == pl.num_programs(0) - 1)
    def _():
        loss_ref[...] = loss_ref[...] * (1.0 / total_rows)


# ----------------------------------------------------------------------------
# Wrappers
# ----------------------------------------------------------------------------
def _mlp_single(x, w1, b1, w2, b2):
    """Grid-less single-block call for small problems: no pipeline scaffolding."""
    B = x.shape[0]
    return pl.pallas_call(
        _mlp_kernel,
        out_shape=jax.ShapeDtypeStruct((B, CLASSES), jnp.float32),
        in_specs=[pl.BlockSpec(memory_space=pltpu.MemorySpace.VMEM)] * 5,
        out_specs=pl.BlockSpec(memory_space=pltpu.MemorySpace.VMEM),
    )(x, w1, b1, w2, b2)


def _mlp_tiled(x, w1, b1, w2, b2, block_rows):
    """Batch-tiled path: cdiv grid handles ragged batches, weights stay
    VMEM-resident, batch axis is 'parallel' (both TCs on v7x)."""
    B, D = x.shape
    grid = (pl.cdiv(B, block_rows),)
    return pl.pallas_call(
        _mlp_kernel,
        out_shape=jax.ShapeDtypeStruct((B, CLASSES), jnp.float32),
        grid=grid,
        in_specs=[
            pl.BlockSpec((block_rows, D), lambda i: (i, 0)),
            pl.BlockSpec(w1.shape, lambda i: (0, 0)),
            pl.BlockSpec(b1.shape, lambda i: (0, 0)),
            pl.BlockSpec(w2.shape, lambda i: (0, 0)),
            pl.BlockSpec(b2.shape, lambda i: (0, 0)),
        ],
        out_specs=pl.BlockSpec((block_rows, CLASSES), lambda i: (i, 0)),
        compiler_params=pltpu.CompilerParams(
            dimension_semantics=("parallel",)),
    )(x, w1, b1, w2, b2)


def mlp_forward(x, w1, b1, w2, b2):
    B, D = x.shape
    footprint = _lane_padded_bytes(B, D) + _lane_padded_bytes(B, CLASSES)
    if footprint <= _SMALL_BUDGET:
        return _mlp_single(x, w1, b1, w2, b2)
    return _mlp_tiled(x, w1, b1, w2, b2, _choose_block_rows(B, D))


def mlp_forward_loss(x, w1, b1, w2, b2, y):
    """Fused forward + mean cross-entropy (matches F.cross_entropy with
    integer class targets, reduction='mean'), batch-tiled with an
    accumulating (1,1) output block."""
    B, D = x.shape
    y2 = y.astype(jnp.int32).reshape(B, 1)
    block_rows = _choose_block_rows(B, D)
    grid = (pl.cdiv(B, block_rows),)
    kernel = functools.partial(_mlp_loss_kernel, total_rows=B)
    loss = pl.pallas_call(
        kernel,
        out_shape=jax.ShapeDtypeStruct((1, 1), jnp.float32),
        grid=grid,
        in_specs=[
            pl.BlockSpec((block_rows, D), lambda i: (i, 0)),
            pl.BlockSpec(w1.shape, lambda i: (0, 0)),
            pl.BlockSpec(b1.shape, lambda i: (0, 0)),
            pl.BlockSpec(w2.shape, lambda i: (0, 0)),
            pl.BlockSpec(b2.shape, lambda i: (0, 0)),
            pl.BlockSpec((block_rows, 1), lambda i: (i, 0)),
        ],
        out_specs=pl.BlockSpec((1, 1), lambda i: (0, 0)),
        compiler_params=pltpu.CompilerParams(
            dimension_semantics=("arbitrary",)),
    )(x, w1, b1, w2, b2, y2)
    return loss[0, 0]


# ----------------------------------------------------------------------------
# Module-equivalent wrapper
# ----------------------------------------------------------------------------
class PallasModule:
    """JAX/Pallas equivalent of TorchModule."""

    def __init__(self, input_size, key):
        k1, k2, k3, k4 = jax.random.split(key, 4)
        bound1 = 1.0 / (input_size ** 0.5)
        bound2 = 1.0 / (HIDDEN ** 0.5)
        self.w1 = jax.random.uniform(k1, (input_size, HIDDEN), jnp.float32,
                                     -bound1, bound1)
        self.b1 = jax.random.uniform(k2, (1, HIDDEN), jnp.float32,
                                     -bound1, bound1)
        self.w2 = jax.random.uniform(k3, (HIDDEN, CLASSES), jnp.float32,
                                     -bound2, bound2)
        self.b2 = jax.random.uniform(k4, (1, CLASSES), jnp.float32,
                                     -bound2, bound2)

    def __call__(self, x, y=None):
        if y is not None:
            return mlp_forward_loss(x, self.w1, self.b1, self.w2, self.b2, y)
        return mlp_forward(x, self.w1, self.b1, self.w2, self.b2)


if __name__ == "__main__":
    key = jax.random.PRNGKey(0)
    k_params, k_x, k_y, k_xb, k_yb = jax.random.split(key, 5)

    batch, input_size = 8, 32
    model = PallasModule(input_size, k_params)

    def ref_logits(xv):
        h = jnp.maximum(xv @ model.w1 + model.b1, 0.0)
        return jnp.maximum(h @ model.w2 + model.b2, 0.0)

    def ref_loss(xv, yv):
        o = ref_logits(xv)
        lse = jax.nn.logsumexp(o, axis=-1)
        return jnp.mean(lse - o[jnp.arange(xv.shape[0]), yv])

    # --- small batch: grid-less logits path + single-block loss path
    x = jax.random.normal(k_x, (batch, input_size), jnp.float32)
    y = jax.random.randint(k_y, (batch,), 0, CLASSES, jnp.int32)

    y_pred = jax.block_until_ready(model(x))
    assert y_pred.shape == (batch, CLASSES)
    assert jnp.allclose(y_pred, ref_logits(x), atol=1e-4)

    loss = jax.block_until_ready(model(x, y))
    assert loss.shape == ()
    assert jnp.allclose(loss, ref_loss(x, y), atol=1e-4)

    # --- large, non-multiple-of-tile batch: exercises the cdiv grid, the
    #     ragged last block, and the accumulating (masked) loss path.
    big_b = 10000
    xb = jax.random.normal(k_xb, (big_b, input_size), jnp.float32)
    yb = jax.random.randint(k_yb, (big_b,), 0, CLASSES, jnp.int32)

    yb_pred = jax.block_until_ready(model(xb))
    assert yb_pred.shape == (big_b, CLASSES)
    assert jnp.allclose(yb_pred, ref_logits(xb), atol=1e-4)

    loss_b = jax.block_until_ready(model(xb, yb))
    assert loss_b.shape == ()
    assert jnp.allclose(loss_b, ref_loss(xb, yb), rtol=1e-3, atol=1e-3)

    print("KERNEL_OK")
</pallas_src>

<mosaic_0001>
module attributes {stable_mosaic.version = 11 : i64} {
  func.func @_mlp_kernel(%arg0: memref<8x32xf32, #tpu.memory_space<vmem>>, %arg1: memref<32x5xf32, #tpu.memory_space<vmem>>, %arg2: memref<1x5xf32, #tpu.memory_space<vmem>>, %arg3: memref<5x3xf32, #tpu.memory_space<vmem>>, %arg4: memref<1x3xf32, #tpu.memory_space<vmem>>, %arg5: memref<8x3xf32, #tpu.memory_space<vmem>>) attributes {dimension_semantics = [], scalar_prefetch = 0 : i64, scratch_operands = 0 : i64, tpu.core_type = #tpu.core_type<tc>} {
    %c0 = arith.constant 0 : index
    %c0_0 = arith.constant 0 : index
    %0 = vector.load %arg0[%c0, %c0_0] : memref<8x32xf32, #tpu.memory_space<vmem>>, vector<8x32xf32>
    %c0_1 = arith.constant 0 : index
    %c0_2 = arith.constant 0 : index
    %1 = vector.load %arg1[%c0_1, %c0_2] : memref<32x5xf32, #tpu.memory_space<vmem>>, vector<32x5xf32>
    %cst = arith.constant dense<0.000000e+00> : vector<8x5xf32>
    %2 = tpu.matmul %0, %1, %cst {dimension_numbers = #tpu.dot_dimension_numbers<[1], [0], [0], [1], [0, 0, 1, 1], [], []>} : vector<8x32xf32>, vector<32x5xf32>, vector<8x5xf32> -> vector<8x5xf32>
    %c0_3 = arith.constant 0 : index
    %c0_4 = arith.constant 0 : index
    %3 = vector.load %arg2[%c0_3, %c0_4] : memref<1x5xf32, #tpu.memory_space<vmem>>, vector<1x5xf32>
    %4 = vector.broadcast %3 : vector<1x5xf32> to vector<8x5xf32>
    %5 = arith.addf %2, %4 : vector<8x5xf32>
    %cst_5 = arith.constant 0.000000e+00 : f32
    %6 = vector.broadcast %cst_5 : f32 to vector<8x5xf32>
    %7 = arith.maximumf %5, %6 : vector<8x5xf32>
    %c0_6 = arith.constant 0 : index
    %c0_7 = arith.constant 0 : index
    %8 = vector.load %arg3[%c0_6, %c0_7] : memref<5x3xf32, #tpu.memory_space<vmem>>, vector<5x3xf32>
    %cst_8 = arith.constant dense<0.000000e+00> : vector<8x3xf32>
    %9 = tpu.matmul %7, %8, %cst_8 {dimension_numbers = #tpu.dot_dimension_numbers<[1], [0], [0], [1], [0, 0, 1, 1], [], []>} : vector<8x5xf32>, vector<5x3xf32>, vector<8x3xf32> -> vector<8x3xf32>
    %c0_9 = arith.constant 0 : index
    %c0_10 = arith.constant 0 : index
    %10 = vector.load %arg4[%c0_9, %c0_10] : memref<1x3xf32, #tpu.memory_space<vmem>>, vector<1x3xf32>
    %11 = vector.broadcast %10 : vector<1x3xf32> to vector<8x3xf32>
    %12 = arith.addf %9, %11 : vector<8x3xf32>
    %cst_11 = arith.constant 0.000000e+00 : f32
    %13 = vector.broadcast %cst_11 : f32 to vector<8x3xf32>
    %14 = arith.maximumf %12, %13 : vector<8x3xf32>
    %c0_12 = arith.constant 0 : index
    %c0_13 = arith.constant 0 : index
    %15 = vector.load %arg5[%c0_12, %c0_13] : memref<8x3xf32, #tpu.memory_space<vmem>>, vector<8x3xf32>
    tpu.vector_store %arg5[%c0_12, %c0_13], %14 {strides = array<i32>} : memref<8x3xf32, #tpu.memory_space<vmem>>, vector<8x3xf32>,
    return
  }
}

</mosaic_0001>

<llo_original>
// kernel: tpu_custom_call.1
$region0: #{tpu_custom_call.1}
  #allocation0 [shape = 'u32[]', space=smem, size = 0x4, offset = 0x4, fixed_abs, tag = 'smem constant byte address 0x4 - core index']
  #allocation1 [shape = 'u32[144,128]{1,0:T(1,128)}', space=vmem, size = 0x12000, scoped, tag = 'internal scratch']
  %s0 = inlined_call_operand.vmem [shape: f32[8,32], index: 0, kind: input, shape index: {}]
  %s1 = inlined_call_operand.vmem [shape: f32[32,5], index: 1, kind: input, shape index: {}]
  %s2 = inlined_call_operand.vmem [shape: f32[1,5], index: 2, kind: input, shape index: {}]
  %s3 = inlined_call_operand.vmem [shape: f32[5,3], index: 3, kind: input, shape index: {}]
  %s4 = inlined_call_operand.vmem [shape: f32[1,3], index: 4, kind: input, shape index: {}]
  %s5 = inlined_call_operand.vmem [shape: f32[8,3], index: 5, kind: output, shape index: {}]
  %s6 = sld [smem:[#allocation0]]
  $region30: #{tpu_custom_call.1} parent=0
    _
  %s8 = ssub.s32 1, %s6
  %s9 = scalar_select 0, %s8, %s6
  // Predicated region
  $region2: #{tpu_custom_call.1} parent=0 // pred_check
    _
  $region3: #{tpu_custom_call.1} parent=0 // pred_check_branch
    %11 = sbr.rel (0) target = $region5
  $region4: #{tpu_custom_call.1} parent=0 // pred_region
    _
  $region5: #{tpu_custom_call.1} parent=0 // pred_fallthru
    _
  // Predicated region
  $region6: #{tpu_custom_call.1} parent=0 // pred_check
    _
  $region7: #{tpu_custom_call.1} parent=0 // pred_check_branch
    %13 = sbr.rel (0) target = $region9
  $region8: #{tpu_custom_call.1} parent=0 // pred_region
    _
  $region9: #{tpu_custom_call.1} parent=0 // pred_fallthru
    _
  // Predicated region
  $region10: #{tpu_custom_call.1} parent=0 // pred_check
    _
  $region11: #{tpu_custom_call.1} parent=0 // pred_check_branch
    %15 = sbr.rel (0) target = $region13
  $region12: #{tpu_custom_call.1} parent=0 // pred_region
    _
  $region13: #{tpu_custom_call.1} parent=0 // pred_fallthru
    _
  // Predicated region
  $region14: #{tpu_custom_call.1} parent=0 // pred_check
    _
  $region15: #{tpu_custom_call.1} parent=0 // pred_check_branch
    %17 = sbr.rel (0) target = $region17
  $region16: #{tpu_custom_call.1} parent=0 // pred_region
    _
  $region17: #{tpu_custom_call.1} parent=0 // pred_fallthru
    _
  // Predicated region
  $region18: #{tpu_custom_call.1} parent=0 // pred_check
    _
  $region19: #{tpu_custom_call.1} parent=0 // pred_check_branch
    %19 = sbr.rel (0) target = $region21
  $region20: #{tpu_custom_call.1} parent=0 // pred_region
    _
  $region21: #{tpu_custom_call.1} parent=0 // pred_fallthru
    _
  %v20 = vld [vmem:[%s0] sm:$0xff]
  %v21 = vld [vmem:[%s1] sm:$0xff]
  %v22 = vld [vmem:[%s1 + $0x8] sm:$0xff]
  %v23 = vld [vmem:[%s1 + $0x10] sm:$0xff]
  %v24 = vld [vmem:[%s1 + $0x18] sm:$0xff]
  %v25 = vld [vmem:[%s2] sm:$0x1]
  %v27 = vlaneseq
  %v28 = vshrl.u32 %v27, 7
  %v29 = vsub.s32 0, %v28
  %v30 = vrot.slane %v25, %v29
  %vm32 = vcmask 261120
  %v34 = vsel %vm32, %v20, 0
  %36 = vmatprep.subr.mxu0 0.0
  %37 = vmatpush1.msra.mxu0 %v21
  %38 = vmatprep.subr.mxu0 0.0
  %39 = vmatpush1.msra.mxu0 %v22
  %40 = vmatprep.subr.mxu0 0.0
  %41 = vmatpush1.msra.mxu0 %v23
  %42 = vmatprep.subr.mxu0 0.0
  %43 = vmatpush1.msra.mxu0 %v24
  %44 = vmatprep.subr.mxu0 0.0
  %45 = vmatpush1.msra.mxu0 0.0
  %46 = vmatprep.subr.mxu0 0.0
  %47 = vmatpush1.msra.mxu0 0.0
  %48 = vmatprep.subr.mxu0 0.0
  %49 = vmatpush1.msra.mxu0 0.0
  %50 = vmatprep.subr.mxu0 0.0
  %51 = vmatpush1.msra.mxu0 0.0
  %52 = vmatprep.subr.mxu0 0.0
  %53 = vmatpush1.msra.mxu0 0.0
  %54 = vmatprep.subr.mxu0 0.0
  %55 = vmatpush1.msra.mxu0 0.0
  %56 = vmatprep.subr.mxu0 0.0
  %57 = vmatpush1.msra.mxu0 0.0
  %58 = vmatprep.subr.mxu0 0.0
  %59 = vmatpush1.msra.mxu0 0.0
  %60 = vmatprep.subr.mxu0 0.0
  %61 = vmatpush1.msra.mxu0 0.0
  %62 = vmatprep.subr.mxu0 0.0
  %63 = vmatpush1.msra.mxu0 0.0
  %64 = vmatprep.subr.mxu0 0.0
  %65 = vmatpush1.msra.mxu0 0.0
  %66 = vmatprep.subr.mxu0 0.0
  %67 = vmatpush1.msra.mxu0 0.0
  %68 = vmatprep.subr.mxu0 0.0
  %69 = vmatpush1.msra.mxu0 0.0
  %70 = vmatprep.subr.mxu0 0.0
  %71 = vmatpush1.msra.mxu0 0.0
  %72 = vmatprep.subr.mxu0 0.0
  %73 = vmatpush1.msra.mxu0 0.0
  %74 = vmatprep.subr.mxu0 0.0
  %75 = vmatpush1.msra.mxu0 0.0
  %76 = vmatprep.subr.mxu0 0.0
  %77 = vmatpush1.msra.mxu0 0.0
  %78 = vmatprep.subr.mxu0 0.0
  %79 = vmatpush1.msra.mxu0 0.0
  %80 = vmatprep.subr.mxu0 0.0
  %81 = vmatpush1.msra.mxu0 0.0
  %82 = vmatprep.subr.mxu0 0.0
  %83 = vmatpush1.msra.mxu0 0.0
  %84 = vmatprep.subr.mxu0 0.0
  %85 = vmatpush1.msra.mxu0 0.0
  %86 = vmatprep.subr.mxu0 0.0
  %87 = vmatpush1.msra.mxu0 0.0
  %88 = vmatprep.subr.mxu0 0.0
  %89 = vmatpush1.msra.mxu0 0.0
  %90 = vmatprep.subr.mxu0 0.0
  %91 = vmatpush1.msra.mxu0 0.0
  %92 = vmatprep.subr.mxu0 0.0
  %93 = vmatpush1.msra.mxu0 0.0
  %94 = vmatprep.subr.mxu0 0.0
  %95 = vmatpush1.msra.mxu0 0.0
  %96 = vmatprep.subr.mxu0 0.0
  %97 = vmatpush1.msra.mxu0 0.0
  %98 = vmatprep.subr.mxu0 0.0
  %99 = vmatpush1.msra.mxu0 0.0
  %100 = vmatprep.mubr.f32.mxu0 0.0
  %101 = vmatmul.mubr.f32.gmra.mrb[0].mxu0 %v34
  %v102 = vpop.f32.mrb[0].mxu0
  %v103 = vadd.f32 %v30, %v102
  %v104 = vpop.f32.mrb[0].mxu0
  %105 = vdwg.mxu0
  %v106 = vmax.f32 %v103, 0.0
  %v107 = vld [vmem:[%s3] sm:$0x1f]
  %v108 = vld [vmem:[%s4] sm:$0x1]
  %v110 = vlaneseq
  %v111 = vshrl.u32 %v110, 7
  %v112 = vsub.s32 0, %v111
  %v113 = vrot.slane %v108, %v112
  %vm115 = vcmask 39936
  %v117 = vsel %vm115, %v106, 0
  %vm119 = vcmask 1044480
  %v121 = vsel %vm119, %v107, 0
  %123 = vmatprep.subr.mxu0 0.0
  %124 = vmatpush1.msra.mxu0 %v121
  %125 = vmatprep.subr.mxu0 0.0
  %126 = vmatpush1.msra.mxu0 0.0
  %127 = vmatprep.subr.mxu0 0.0
  %128 = vmatpush1.msra.mxu0 0.0
  %129 = vmatprep.subr.mxu0 0.0
  %130 = vmatpush1.msra.mxu0 0.0
  %131 = vmatprep.subr.mxu0 0.0
  %132 = vmatpush1.msra.mxu0 0.0
  %133 = vmatprep.subr.mxu0 0.0
  %134 = vmatpush1.msra.mxu0 0.0
  %135 = vmatprep.subr.mxu0 0.0
  %136 = vmatpush1.msra.mxu0 0.0
  %137 = vmatprep.subr.mxu0 0.0
  %138 = vmatpush1.msra.mxu0 0.0
  %139 = vmatprep.subr.mxu0 0.0
  %140 = vmatpush1.msra.mxu0 0.0
  %141 = vmatprep.subr.mxu0 0.0
  %142 = vmatpush1.msra.mxu0 0.0
  %143 = vmatprep.subr.mxu0 0.0
  %144 = vmatpush1.msra.mxu0 0.0
  %145 = vmatprep.subr.mxu0 0.0
  %146 = vmatpush1.msra.mxu0 0.0
  %147 = vmatprep.subr.mxu0 0.0
  %148 = vmatpush1.msra.mxu0 0.0
  %149 = vmatprep.subr.mxu0 0.0
  %150 = vmatpush1.msra.mxu0 0.0
  %151 = vmatprep.subr.mxu0 0.0
  %152 = vmatpush1.msra.mxu0 0.0
  %153 = vmatprep.subr.mxu0 0.0
  %154 = vmatpush1.msra.mxu0 0.0
  %155 = vmatprep.subr.mxu0 0.0
  %156 = vmatpush1.msra.mxu0 0.0
  %157 = vmatprep.subr.mxu0 0.0
  %158 = vmatpush1.msra.mxu0 0.0
  %159 = vmatprep.subr.mxu0 0.0
  %160 = vmatpush1.msra.mxu0 0.0
  %161 = vmatprep.subr.mxu0 0.0
  %162 = vmatpush1.msra.mxu0 0.0
  %163 = vmatprep.subr.mxu0 0.0
  %164 = vmatpush1.msra.mxu0 0.0
  %165 = vmatprep.subr.mxu0 0.0
  %166 = vmatpush1.msra.mxu0 0.0
  %167 = vmatprep.subr.mxu0 0.0
  %168 = vmatpush1.msra.mxu0 0.0
  %169 = vmatprep.subr.mxu0 0.0
  %170 = vmatpush1.msra.mxu0 0.0
  %171 = vmatprep.subr.mxu0 0.0
  %172 = vmatpush1.msra.mxu0 0.0
  %173 = vmatprep.subr.mxu0 0.0
  %174 = vmatpush1.msra.mxu0 0.0
  %175 = vmatprep.subr.mxu0 0.0
  %176 = vmatpush1.msra.mxu0 0.0
  %177 = vmatprep.subr.mxu0 0.0
  %178 = vmatpush1.msra.mxu0 0.0
  %179 = vmatprep.subr.mxu0 0.0
  %180 = vmatpush1.msra.mxu0 0.0
  %181 = vmatprep.subr.mxu0 0.0
  %182 = vmatpush1.msra.mxu0 0.0
  %183 = vmatprep.subr.mxu0 0.0
  %184 = vmatpush1.msra.mxu0 0.0
  %185 = vmatprep.subr.mxu0 0.0
  %186 = vmatpush1.msra.mxu0 0.0
  %187 = vmatprep.mubr.f32.mxu0 0.0
  %188 = vmatmul.mubr.f32.gmra.mrb[0].mxu0 %v117
  %v189 = vpop.f32.mrb[0].mxu0
  %v190 = vadd.f32 %v113, %v189
  %v191 = vpop.f32.mrb[0].mxu0
  %192 = vdwg.mxu0
  %v193 = vmax.f32 %v190, 0.0
  %vm194 = vcmask 23552
  %195 = vst.msk [vmem:[%s5] sm:$0xff] %vm194, %v193
  // Predicated region
  $region22: #{tpu_custom_call.1} parent=0 // pred_check
    _
  $region23: #{tpu_custom_call.1} parent=0 // pred_check_branch
    %197 = sbr.rel (0) target = $region25
  $region24: #{tpu_custom_call.1} parent=0 // pred_region
    _
  $region25: #{tpu_custom_call.1} parent=0 // pred_fallthru
    _
  // Predicated region
  $region26: #{tpu_custom_call.1} parent=0 // pred_check
    _
  $region27: #{tpu_custom_call.1} parent=0 // pred_check_branch
    %199 = sbr.rel (0) target = $region29
  $region28: #{tpu_custom_call.1} parent=0 // pred_region
    _
  $region29: #{tpu_custom_call.1} parent=0 // pred_fallthru
    _

</llo_original>
